<compile_context>
chip_gen: v7x
topology: tpu7x:2x2x1
jax: 0.10.0
libtpu: 0.0.40
codegen_flags: <defaults>
</compile_context>

<pallas_src>
import jax
import jax.numpy as jnp
from jax.experimental import pallas as pl
from jax.experimental.pallas import tpu as pltpu


def _ln_body(x_ref, w_ref, b_ref, o_ref):
    """LayerNorm over the channel axis of a (bb, C, T) block.

    Channels sit on sublanes, spatial positions on lanes, so every reduction
    stays inside a single lane column: masked (out-of-bounds) lanes of a
    ragged edge block can never contaminate valid columns.
    """
    x = x_ref[...].astype(jnp.float32)                 # (bb, C, T)
    mu = jnp.mean(x, axis=1, keepdims=True)            # (bb, 1, T)
    xc = x - mu
    var = jnp.mean(xc * xc, axis=1, keepdims=True)     # biased (population) variance
    inv = jax.lax.rsqrt(var + 1e-5)                    # (bb, 1, T)
    w = w_ref[...]                                     # (1, C, 1), f32
    if b_ref is None:
        # BiasFree: no mean subtraction in the output (matches Restormer).
        y = x * (inv * w)
    else:
        y = xc * (inv * w) + b_ref[...]
    o_ref[...] = y.astype(o_ref.dtype)


def _ln_withbias_kernel(x_ref, w_ref, b_ref, o_ref):
    _ln_body(x_ref, w_ref, b_ref, o_ref)


def _ln_biasfree_kernel(x_ref, w_ref, o_ref):
    _ln_body(x_ref, w_ref, None, o_ref)


def _vmem_capacity_bytes():
    try:
        return int(pltpu.get_tpu_info().vmem_capacity_bytes)
    except Exception:
        return 128 << 20  # v5e/v6e physical VMEM; conservative fallback


def _default_target_block_bytes(vmem_capacity):
    # ~1/16 of physical VMEM of f32 working set per block:
    #   v7x (64 MiB VMEM)  -> 4 MiB blocks
    #   v5e/v6e (128 MiB)  -> 6 MiB blocks (clamped)
    return int(min(6 << 20, max(2 << 20, vmem_capacity // 16)))


def _choose_tiles(batch, c, hw, target_block_bytes):
    """Pick (bb, tile_hw) so one block holds ~target_block_bytes of f32 work.

    The budget is expressed in f32 bytes (in-kernel statistics are f32) so
    narrow input dtypes do not blow up the VMEM working set.
    """
    f32 = 4
    lanes_budget = max(128, target_block_bytes // max(1, c * f32))
    tile_hw = (lanes_budget // 128) * 128
    if tile_hw < hw:
        return 1, tile_hw                      # tile over H*W (lane axis)
    # Whole image fits in one lane tile: block over batch instead so each
    # grid step still moves ~target bytes (small-HW / large-B regime).
    bb = max(1, target_block_bytes // max(1, c * hw * f32))
    return min(bb, batch), hw


def layernorm_nchw(x, weight, bias=None, *, layernorm_type="WithBias",
                   target_block_bytes=None):
    """Pallas equivalent of LayerNorm(dim, LayerNorm_type).forward on NCHW x."""
    b, c, h, w = x.shape
    hw = h * w
    bias_free = (layernorm_type == "BiasFree")

    vmem_capacity = _vmem_capacity_bytes()
    if target_block_bytes is None:
        target_block_bytes = _default_target_block_bytes(vmem_capacity)

    # NCHW-native: reduce over channels (sublanes), H*W on the lane axis.
    # No transpose, no pad, no crop.
    x3 = x.reshape(b, c, hw)
    w3 = weight.astype(jnp.float32).reshape(1, c, 1)

    bb, tile_hw = _choose_tiles(b, c, hw, target_block_bytes)
    grid = (pl.cdiv(b, bb), pl.cdiv(hw, tile_hw))
    block = (bb, c, tile_hw)

    x_spec = pl.BlockSpec(block, lambda i, j: (i, 0, j))
    o_spec = pl.BlockSpec(block, lambda i, j: (i, 0, j))
    p_spec = pl.BlockSpec((1, c, 1), lambda i, j: (0, 0, 0))

    # VMEM budget: double-buffered in+out blocks (native dtype) plus a generous
    # allowance for f32 elementwise temps, clamped under physical capacity
    # minus headroom for Mosaic internal scratch.
    block_elems = bb * c * tile_hw
    want = 4 * block_elems * x.dtype.itemsize + 6 * block_elems * 4 + (2 << 20)
    cap = max(32 << 20, min(64 << 20, vmem_capacity - (16 << 20)))
    vmem_limit = int(min(cap, max(32 << 20, want)))

    compiler_params = pltpu.CompilerParams(
        dimension_semantics=("parallel", "parallel"),
        vmem_limit_bytes=vmem_limit,
    )
    out_shape = jax.ShapeDtypeStruct((b, c, hw), x.dtype)

    if bias_free:
        out3 = pl.pallas_call(
            _ln_biasfree_kernel,
            out_shape=out_shape,
            grid_spec=pltpu.PrefetchScalarGridSpec(
                num_scalar_prefetch=0,
                grid=grid,
                in_specs=[x_spec, p_spec],
                out_specs=o_spec),
            compiler_params=compiler_params,
        )(x3, w3)
    else:
        b3 = (jnp.zeros((1, c, 1), jnp.float32) if bias is None
              else bias.astype(jnp.float32).reshape(1, c, 1))
        out3 = pl.pallas_call(
            _ln_withbias_kernel,
            out_shape=out_shape,
            grid_spec=pltpu.PrefetchScalarGridSpec(
                num_scalar_prefetch=0,
                grid=grid,
                in_specs=[x_spec, p_spec, p_spec],
                out_specs=o_spec),
            compiler_params=compiler_params,
        )(x3, w3, b3)

    return out3.reshape(b, c, h, w)


def _reference_nchw(x, weight, bias, layernorm_type):
    """Plain-JAX reference with identical semantics (reduce over channel axis)."""
    xf = x.astype(jnp.float32)
    mu = jnp.mean(xf, axis=1, keepdims=True)
    var = jnp.mean((xf - mu) ** 2, axis=1, keepdims=True)
    inv = 1.0 / jnp.sqrt(var + 1e-5)
    wch = weight.astype(jnp.float32).reshape(1, -1, 1, 1)
    if layernorm_type == "BiasFree":
        y = xf * inv * wch
    else:
        y = (xf - mu) * inv * wch + bias.astype(jnp.float32).reshape(1, -1, 1, 1)
    return y.astype(x.dtype)


if __name__ == "__main__":
    key = jax.random.PRNGKey(0)
    kx, kw, kb = jax.random.split(key, 3)
    ok = True

    def check(name, x, weight, bias, ln_type, **kwargs):
        out = jax.block_until_ready(
            layernorm_nchw(x, weight, bias, layernorm_type=ln_type, **kwargs))
        ref = _reference_nchw(x, weight, bias, ln_type)
        err = float(jnp.max(jnp.abs(out - ref)))
        if (not bool(jnp.isfinite(err))) or err > 1e-4:
            print(f"{name} / {ln_type}: max abs err {err}")
            return False
        return True

    # Case 1: whole-image lane tile, batch-blocked grid (H*W = 256).
    B, C, H, W = 2, 32, 16, 16
    x = jax.random.normal(kx, (B, C, H, W), dtype=jnp.float32)
    weight = jnp.ones((C,), jnp.float32) + 0.1 * jax.random.normal(kw, (C,), jnp.float32)
    bias = 0.1 * jax.random.normal(kb, (C,), jnp.float32)
    for t in ("WithBias", "BiasFree"):
        ok &= check("batch-blocked", x, weight, bias, t)

    # Case 2: H*W = 120 (not a multiple of 128) — no pad/crop path exists anymore.
    C2, H2, W2 = 4, 12, 10
    x2 = jax.random.normal(kx, (B, C2, H2, W2), dtype=jnp.float32)
    w2 = jnp.ones((C2,), jnp.float32) + 0.1 * jax.random.normal(kw, (C2,), jnp.float32)
    b2 = 0.1 * jax.random.normal(kb, (C2,), jnp.float32)
    for t in ("WithBias", "BiasFree"):
        ok &= check("odd-hw", x2, w2, b2, t)

    # Case 3: force the hw-tiled path with a ragged (masked) last block:
    # tile_hw = 1024 lanes, H*W = 1600 -> 2 lane blocks, second one partial.
    C3, H3, W3 = 8, 40, 40
    x3 = jax.random.normal(kx, (B, C3, H3, W3), dtype=jnp.float32)
    w3 = jnp.ones((C3,), jnp.float32) + 0.1 * jax.random.normal(kw, (C3,), jnp.float32)
    b3 = 0.1 * jax.random.normal(kb, (C3,), jnp.float32)
    for t in ("WithBias", "BiasFree"):
        ok &= check("hw-tiled-ragged", x3, w3, b3, t, target_block_bytes=32 * 1024)

    if ok:
        print("KERNEL_OK")
</pallas_src>

<mosaic_0001>
module attributes {stable_mosaic.version = 11 : i64} {
  func.func @_ln_withbias_kernel(%arg0: i32, %arg1: i32, %arg2: memref<2x32x256xf32, #tpu.memory_space<vmem>>, %arg3: memref<1x32x1xf32, #tpu.memory_space<vmem>>, %arg4: memref<1x32x1xf32, #tpu.memory_space<vmem>>, %arg5: memref<2x32x256xf32, #tpu.memory_space<vmem>>) attributes {dimension_semantics = [#tpu.dimension_semantics<parallel>, #tpu.dimension_semantics<parallel>], iteration_bounds = array<i64: 1, 1>, scalar_prefetch = 0 : i64, scratch_operands = 0 : i64, tpu.core_type = #tpu.core_type<tc>, window_params = [{transform_indices = @transform_0, window_bounds = array<i64: 2, 32, 256>}, {pipeline_mode = #tpu.pipeline_mode<synchronous>, transform_indices = @transform_1, window_bounds = array<i64: 1, 32, 1>}, {pipeline_mode = #tpu.pipeline_mode<synchronous>, transform_indices = @transform_2, window_bounds = array<i64: 1, 32, 1>}, {transform_indices = @transform_3, window_bounds = array<i64: 2, 32, 256>}]} {
    %c0 = arith.constant 0 : index
    %c0_0 = arith.constant 0 : index
    %c0_1 = arith.constant 0 : index
    %0 = vector.load %arg2[%c0, %c0_0, %c0_1] : memref<2x32x256xf32, #tpu.memory_space<vmem>>, vector<2x32x256xf32>
    %cst = arith.constant dense<0.000000e+00> : vector<2x256xf32>
    %1 = vector.multi_reduction <add>, %0, %cst [1] : vector<2x32x256xf32> to vector<2x256xf32>
    %2 = vector.shape_cast %1 : vector<2x256xf32> to vector<2x1x256xf32>
    %cst_2 = arith.constant 3.200000e+01 : f32
    %3 = vector.broadcast %cst_2 : f32 to vector<2x1x256xf32>
    %4 = arith.divf %2, %3 : vector<2x1x256xf32>
    %5 = vector.broadcast %4 : vector<2x1x256xf32> to vector<2x32x256xf32>
    %6 = arith.subf %0, %5 : vector<2x32x256xf32>
    %7 = arith.mulf %6, %6 : vector<2x32x256xf32>
    %cst_3 = arith.constant dense<0.000000e+00> : vector<2x256xf32>
    %8 = vector.multi_reduction <add>, %7, %cst_3 [1] : vector<2x32x256xf32> to vector<2x256xf32>
    %9 = vector.shape_cast %8 : vector<2x256xf32> to vector<2x1x256xf32>
    %cst_4 = arith.constant 3.200000e+01 : f32
    %10 = vector.broadcast %cst_4 : f32 to vector<2x1x256xf32>
    %11 = arith.divf %9, %10 : vector<2x1x256xf32>
    %cst_5 = arith.constant 9.99999974E-6 : f32
    %12 = vector.broadcast %cst_5 : f32 to vector<2x1x256xf32>
    %13 = arith.addf %11, %12 : vector<2x1x256xf32>
    %14 = math.rsqrt %13 : vector<2x1x256xf32>
    %c0_6 = arith.constant 0 : index
    %c0_7 = arith.constant 0 : index
    %c0_8 = arith.constant 0 : index
    %15 = vector.load %arg3[%c0_6, %c0_7, %c0_8] : memref<1x32x1xf32, #tpu.memory_space<vmem>>, vector<1x32x1xf32>
    %16 = vector.broadcast %14 : vector<2x1x256xf32> to vector<2x32x256xf32>
    %17 = vector.broadcast %15 : vector<1x32x1xf32> to vector<2x32x256xf32>
    %18 = arith.mulf %16, %17 : vector<2x32x256xf32>
    %19 = arith.mulf %6, %18 : vector<2x32x256xf32>
    %c0_9 = arith.constant 0 : index
    %c0_10 = arith.constant 0 : index
    %c0_11 = arith.constant 0 : index
    %20 = vector.load %arg4[%c0_9, %c0_10, %c0_11] : memref<1x32x1xf32, #tpu.memory_space<vmem>>, vector<1x32x1xf32>
    %21 = vector.broadcast %20 : vector<1x32x1xf32> to vector<2x32x256xf32>
    %22 = arith.addf %19, %21 : vector<2x32x256xf32>
    %c0_12 = arith.constant 0 : index
    %c0_13 = arith.constant 0 : index
    %c0_14 = arith.constant 0 : index
    %23 = vector.load %arg5[%c0_12, %c0_13, %c0_14] : memref<2x32x256xf32, #tpu.memory_space<vmem>>, vector<2x32x256xf32>
    tpu.vector_store %arg5[%c0_12, %c0_13, %c0_14], %22 {strides = array<i32>} : memref<2x32x256xf32, #tpu.memory_space<vmem>>, vector<2x32x256xf32>,
    return
  }
  func.func @transform_0(%arg0: i32, %arg1: i32) -> (i32, i32, i32) {
    %c0_i32 = arith.constant 0 : i32
    %c0_i32_0 = arith.constant 0 : i32
    return %arg0, %c0_i32, %arg1 : i32, i32, i32
  }
  func.func @transform_1(%arg0: i32, %arg1: i32) -> (i32, i32, i32) {
    %c0_i32 = arith.constant 0 : i32
    %c0_i32_0 = arith.constant 0 : i32
    %c0_i32_1 = arith.constant 0 : i32
    %c0_i32_2 = arith.constant 0 : i32
    return %c0_i32, %c0_i32_0, %c0_i32_1 : i32, i32, i32
  }
  func.func @transform_2(%arg0: i32, %arg1: i32) -> (i32, i32, i32) {
    %c0_i32 = arith.constant 0 : i32
    %c0_i32_0 = arith.constant 0 : i32
    %c0_i32_1 = arith.constant 0 : i32
    %c0_i32_2 = arith.constant 0 : i32
    return %c0_i32, %c0_i32_0, %c0_i32_1 : i32, i32, i32
  }
  func.func @transform_3(%arg0: i32, %arg1: i32) -> (i32, i32, i32) {
    %c0_i32 = arith.constant 0 : i32
    %c0_i32_0 = arith.constant 0 : i32
    return %arg0, %c0_i32, %arg1 : i32, i32, i32
  }
}

</mosaic_0001>

<llo_original>
// kernel: tpu_custom_call.1
$region0: #{tpu_custom_call.1}
  #allocation0 [shape = 'u32[]', space=smem, size = 0x4, offset = 0x4, fixed_abs, tag = 'smem constant byte address 0x4 - core index']
  #allocation1 [shape = 'u32[144,128]{1,0:T(1,128)}', space=vmem, size = 0x12000, scoped, tag = 'internal scratch']
  %s0 = inlined_call_operand.hbm [shape: f32[2,32,256], index: 0, kind: input, shape index: {}]
  %s1 = inlined_call_operand.vmem [shape: f32[1,32,1], index: 1, kind: input, shape index: {}]
  %s2 = inlined_call_operand.vmem [shape: f32[1,32,1], index: 2, kind: input, shape index: {}]
  %s3 = inlined_call_operand.hbm [shape: f32[2,32,256], index: 3, kind: output, shape index: {}]
  %s4 = sld [smem:[#allocation0]]
  $region26: #{tpu_custom_call.1} parent=0
    _
  %s6 = ssub.s32 1, %s4
  %s7 = scalar_select 0, %s6, %s4
  $region1: #{tpu_custom_call.1} parent=0
    #allocation2 [shape = 'u8[65536]{0}', space=vmem, size = 0x10000, scoped, tag = 'input window, operand 0, single buffered']
    #allocation3 [shape = 's32[1]{0}', space=sflag, size = 0x4, scoped, tag = 'scoped memory for tpu_custom_call.1']
    #allocation4 [shape = 's32[1]{0}', space=sflag, size = 0x4, scoped, tag = 'scoped memory for tpu_custom_call.1']
    #allocation5 [shape = 'u8[65536]{0}', space=vmem, size = 0x10000, scoped, tag = 'output window, operand 0, single buffered']
    %8 = vsyncpa [#allocation3], 0
    %9 = vsyncpa [#allocation4], 0
    // Predicated region
    $region2: #{tpu_custom_call.1} parent=1 // pred_check
      _
    $region3: #{tpu_custom_call.1} parent=1 // pred_check_branch
      %11 = sbr.rel (0) target = $region5
    $region4: #{tpu_custom_call.1} parent=1 // pred_region
      %s13 = ssub.s32 2048, 2048
      %14 = vsyncadd [#allocation3], %s13
      %s15 = sshll.u32 [#allocation2], 4
      %s16 = int_to_ptr.vmem [resolvable:$true] %s15
      %21 = dma.hbm_to_vmem [thread:$0]  %s0, 2048, %s16, [#allocation3], 256, 256, 16
    $region5: #{tpu_custom_call.1} parent=1 // pred_fallthru
      _
    // Predicated region
    $region6: #{tpu_custom_call.1} parent=1 // pred_check
      _
    $region7: #{tpu_custom_call.1} parent=1 // pred_check_branch
      %23 = sbr.rel (0) target = $region9
    $region8: #{tpu_custom_call.1} parent=1 // pred_region
      _
    $region9: #{tpu_custom_call.1} parent=1 // pred_fallthru
      _
    // Predicated region
    $region10: #{tpu_custom_call.1} parent=1 // pred_check
      _
    $region11: #{tpu_custom_call.1} parent=1 // pred_check_branch
      %25 = sbr.rel (0) target = $region13
    $region12: #{tpu_custom_call.1} parent=1 // pred_region
      _
    $region13: #{tpu_custom_call.1} parent=1 // pred_fallthru
      _
    // Predicated region
    $region14: #{tpu_custom_call.1} parent=1 // pred_check
      _
    $region15: #{tpu_custom_call.1} parent=1 // pred_check_branch
      %27 = sbr.rel (0) target = $region17
    $region16: #{tpu_custom_call.1} parent=1 // pred_region
      %28 = dma.done [#allocation3], 2048
    $region17: #{tpu_custom_call.1} parent=1 // pred_fallthru
      _
    %v29 = vld [vmem:[#allocation2] sm:$0xff]
    %v30 = vld [vmem:[#allocation2 + $0x8] sm:$0xff]
    %v31 = vld [vmem:[#allocation2 + $0x10] sm:$0xff]
    %v32 = vld [vmem:[#allocation2 + $0x18] sm:$0xff]
    %v33 = vld [vmem:[#allocation2 + $0x20] sm:$0xff]
    %v34 = vld [vmem:[#allocation2 + $0x28] sm:$0xff]
    %v35 = vld [vmem:[#allocation2 + $0x30] sm:$0xff]
    %v36 = vld [vmem:[#allocation2 + $0x38] sm:$0xff]
    %v37 = vld [vmem:[#allocation2 + $0x40] sm:$0xff]
    %v38 = vld [vmem:[#allocation2 + $0x48] sm:$0xff]
    %v39 = vld [vmem:[#allocation2 + $0x50] sm:$0xff]
    %v40 = vld [vmem:[#allocation2 + $0x58] sm:$0xff]
    %v41 = vld [vmem:[#allocation2 + $0x60] sm:$0xff]
    %v42 = vld [vmem:[#allocation2 + $0x68] sm:$0xff]
    %v43 = vld [vmem:[#allocation2 + $0x70] sm:$0xff]
    %v44 = vld [vmem:[#allocation2 + $0x78] sm:$0xff]
    %v45 = vadd.f32 %v29, %v31
    %v46 = vadd.f32 %v45, %v33
    %v47 = vadd.f32 %v46, %v35
    %v48 = vrot.slane %v47, 4
    %v49 = vadd.f32 %v47, %v48
    %v50 = vrot.slane %v49, 2
    %v51 = vadd.f32 %v49, %v50
    %v52 = vrot.slane %v51, 1
    %v53 = vadd.f32 %v51, %v52
    %v54 = vadd.f32 %v30, %v32
    %v55 = vadd.f32 %v54, %v34
    %v56 = vadd.f32 %v55, %v36
    %v57 = vrot.slane %v56, 4
    %v58 = vadd.f32 %v56, %v57
    %v59 = vrot.slane %v58, 2
    %v60 = vadd.f32 %v58, %v59
    %v61 = vrot.slane %v60, 1
    %v62 = vadd.f32 %v60, %v61
    %v63 = vadd.f32 %v37, %v39
    %v64 = vadd.f32 %v63, %v41
    %v65 = vadd.f32 %v64, %v43
    %v66 = vrot.slane %v65, 4
    %v67 = vadd.f32 %v65, %v66
    %v68 = vrot.slane %v67, 2
    %v69 = vadd.f32 %v67, %v68
    %v70 = vrot.slane %v69, 1
    %v71 = vadd.f32 %v69, %v70
    %v72 = vadd.f32 %v38, %v40
    %v73 = vadd.f32 %v72, %v42
    %v74 = vadd.f32 %v73, %v44
    %v75 = vrot.slane %v74, 4
    %v76 = vadd.f32 %v74, %v75
    %v77 = vrot.slane %v76, 2
    %v78 = vadd.f32 %v76, %v77
    %v79 = vrot.slane %v78, 1
    %v80 = vadd.f32 %v78, %v79
    %v81 = vrcp.pop 32.0
    %v82 = vmul.f32 %v53, %v81
    %v83 = vmul.f32 %v62, %v81
    %v84 = vmul.f32 %v71, %v81
    %v85 = vmul.f32 %v80, %v81
    %v86 = vsub.f32 %v29, %v82
    %v87 = vsub.f32 %v30, %v83
    %v88 = vsub.f32 %v31, %v82
    %v89 = vsub.f32 %v32, %v83
    %v90 = vsub.f32 %v33, %v82
    %v91 = vsub.f32 %v34, %v83
    %v92 = vsub.f32 %v35, %v82
    %v93 = vsub.f32 %v36, %v83
    %v94 = vsub.f32 %v37, %v84
    %v95 = vsub.f32 %v38, %v85
    %v96 = vsub.f32 %v39, %v84
    %v97 = vsub.f32 %v40, %v85
    %v98 = vsub.f32 %v41, %v84
    %v99 = vsub.f32 %v42, %v85
    %v100 = vsub.f32 %v43, %v84
    %v101 = vsub.f32 %v44, %v85
    %v102 = vmul.f32 %v86, %v86
    %v103 = vmul.f32 %v87, %v87
    %v104 = vmul.f32 %v88, %v88
    %v105 = vmul.f32 %v89, %v89
    %v106 = vmul.f32 %v90, %v90
    %v107 = vmul.f32 %v91, %v91
    %v108 = vmul.f32 %v92, %v92
    %v109 = vmul.f32 %v93, %v93
    %v110 = vmul.f32 %v94, %v94
    %v111 = vmul.f32 %v95, %v95
    %v112 = vmul.f32 %v96, %v96
    %v113 = vmul.f32 %v97, %v97
    %v114 = vmul.f32 %v98, %v98
    %v115 = vmul.f32 %v99, %v99
    %v116 = vmul.f32 %v100, %v100
    %v117 = vmul.f32 %v101, %v101
    %v118 = vadd.f32 %v102, %v104
    %v119 = vadd.f32 %v118, %v106
    %v120 = vadd.f32 %v119, %v108
    %v121 = vrot.slane %v120, 4
    %v122 = vadd.f32 %v120, %v121
    %v123 = vrot.slane %v122, 2
    %v124 = vadd.f32 %v122, %v123
    %v125 = vrot.slane %v124, 1
    %v126 = vadd.f32 %v124, %v125
    %v127 = vadd.f32 %v103, %v105
    %v128 = vadd.f32 %v127, %v107
    %v129 = vadd.f32 %v128, %v109
    %v130 = vrot.slane %v129, 4
    %v131 = vadd.f32 %v129, %v130
    %v132 = vrot.slane %v131, 2
    %v133 = vadd.f32 %v131, %v132
    %v134 = vrot.slane %v133, 1
    %v135 = vadd.f32 %v133, %v134
    %v136 = vadd.f32 %v110, %v112
    %v137 = vadd.f32 %v136, %v114
    %v138 = vadd.f32 %v137, %v116
    %v139 = vrot.slane %v138, 4
    %v140 = vadd.f32 %v138, %v139
    %v141 = vrot.slane %v140, 2
    %v142 = vadd.f32 %v140, %v141
    %v143 = vrot.slane %v142, 1
    %v144 = vadd.f32 %v142, %v143
    %v145 = vadd.f32 %v111, %v113
    %v146 = vadd.f32 %v145, %v115
    %v147 = vadd.f32 %v146, %v117
    %v148 = vrot.slane %v147, 4
    %v149 = vadd.f32 %v147, %v148
    %v150 = vrot.slane %v149, 2
    %v151 = vadd.f32 %v149, %v150
    %v152 = vrot.slane %v151, 1
    %v153 = vadd.f32 %v151, %v152
    %v154 = vmul.f32 %v126, %v81
    %v155 = vmul.f32 %v135, %v81
    %v156 = vmul.f32 %v144, %v81
    %v157 = vmul.f32 %v153, %v81
    %v158 = vadd.f32 %v154, 1e-05
    %v159 = vadd.f32 %v155, 1e-05
    %v160 = vadd.f32 %v156, 1e-05
    %v161 = vadd.f32 %v157, 1e-05
    %v162 = vrsqrt.pop %v158
    %v163 = vrsqrt.pop %v159
    %v164 = vrsqrt.pop %v160
    %v165 = vrsqrt.pop %v161
    %v166 = vld [vmem:[%s1] sm:$0xff]
    %v167 = vld [vmem:[%s1 + $0x8] sm:$0xff]
    %v168 = vld [vmem:[%s1 + $0x10] sm:$0xff]
    %v169 = vld [vmem:[%s1 + $0x18] sm:$0xff]
    %171 = vset.pattern.permute.xlu0 0
    %172 = vperm.xlu0 %171, %v166
    %v173 = vpop.permute.xlu0 %172
    %176 = vset.pattern.permute.xlu0 0
    %177 = vperm.xlu0 %176, %v167
    %v178 = vpop.permute.xlu0 %177
    %181 = vset.pattern.permute.xlu0 0
    %182 = vperm.xlu0 %181, %v168
    %v183 = vpop.permute.xlu0 %182
    %186 = vset.pattern.permute.xlu0 0
    %187 = vperm.xlu0 %186, %v169
    %v188 = vpop.permute.xlu0 %187
    %v190 = vmul.f32 %v162, %v173
    %v191 = vmul.f32 %v163, %v173
    %v192 = vmul.f32 %v162, %v178
    %v193 = vmul.f32 %v163, %v178
    %v194 = vmul.f32 %v162, %v183
    %v195 = vmul.f32 %v163, %v183
    %v196 = vmul.f32 %v162, %v188
    %v197 = vmul.f32 %v163, %v188
    %v198 = vmul.f32 %v164, %v173
    %v199 = vmul.f32 %v165, %v173
    %v200 = vmul.f32 %v164, %v178
    %v201 = vmul.f32 %v165, %v178
    %v202 = vmul.f32 %v164, %v183
    %v203 = vmul.f32 %v165, %v183
    %v204 = vmul.f32 %v164, %v188
    %v205 = vmul.f32 %v165, %v188
    %v206 = vmul.f32 %v86, %v190
    %v207 = vmul.f32 %v87, %v191
    %v208 = vmul.f32 %v88, %v192
    %v209 = vmul.f32 %v89, %v193
    %v210 = vmul.f32 %v90, %v194
    %v211 = vmul.f32 %v91, %v195
    %v212 = vmul.f32 %v92, %v196
    %v213 = vmul.f32 %v93, %v197
    %v214 = vmul.f32 %v94, %v198
    %v215 = vmul.f32 %v95, %v199
    %v216 = vmul.f32 %v96, %v200
    %v217 = vmul.f32 %v97, %v201
    %v218 = vmul.f32 %v98, %v202
    %v219 = vmul.f32 %v99, %v203
    %v220 = vmul.f32 %v100, %v204
    %v221 = vmul.f32 %v101, %v205
    %v222 = vld [vmem:[%s2] sm:$0xff]
    %v223 = vld [vmem:[%s2 + $0x8] sm:$0xff]
    %v224 = vld [vmem:[%s2 + $0x10] sm:$0xff]
    %v225 = vld [vmem:[%s2 + $0x18] sm:$0xff]
    %227 = vset.pattern.permute.xlu0 0
    %228 = vperm.xlu0 %227, %v222
    %v229 = vpop.permute.xlu0 %228
    %232 = vset.pattern.permute.xlu0 0
    %233 = vperm.xlu0 %232, %v223
    %v234 = vpop.permute.xlu0 %233
    %237 = vset.pattern.permute.xlu0 0
    %238 = vperm.xlu0 %237, %v224
    %v239 = vpop.permute.xlu0 %238
    %242 = vset.pattern.permute.xlu0 0
    %243 = vperm.xlu0 %242, %v225
    %v244 = vpop.permute.xlu0 %243
    %v246 = vadd.f32 %v206, %v229
    %v247 = vadd.f32 %v207, %v229
    %v248 = vadd.f32 %v208, %v234
    %v249 = vadd.f32 %v209, %v234
    %v250 = vadd.f32 %v210, %v239
    %v251 = vadd.f32 %v211, %v239
    %v252 = vadd.f32 %v212, %v244
    %v253 = vadd.f32 %v213, %v244
    %v254 = vadd.f32 %v214, %v229
    %v255 = vadd.f32 %v215, %v229
    %v256 = vadd.f32 %v216, %v234
    %v257 = vadd.f32 %v217, %v234
    %v258 = vadd.f32 %v218, %v239
    %v259 = vadd.f32 %v219, %v239
    %v260 = vadd.f32 %v220, %v244
    %v261 = vadd.f32 %v221, %v244
    %262 = vst [vmem:[#allocation5] sm:$0xff] %v246
    %263 = vst [vmem:[#allocation5 + $0x8] sm:$0xff] %v247
    %264 = vst [vmem:[#allocation5 + $0x10] sm:$0xff] %v248
    %265 = vst [vmem:[#allocation5 + $0x18] sm:$0xff] %v249
    %266 = vst [vmem:[#allocation5 + $0x20] sm:$0xff] %v250
    %267 = vst [vmem:[#allocation5 + $0x28] sm:$0xff] %v251
    %268 = vst [vmem:[#allocation5 + $0x30] sm:$0xff] %v252
    %269 = vst [vmem:[#allocation5 + $0x38] sm:$0xff] %v253
    %270 = vst [vmem:[#allocation5 + $0x40] sm:$0xff] %v254
    %271 = vst [vmem:[#allocation5 + $0x48] sm:$0xff] %v255
    %272 = vst [vmem:[#allocation5 + $0x50] sm:$0xff] %v256
    %273 = vst [vmem:[#allocation5 + $0x58] sm:$0xff] %v257
    %274 = vst [vmem:[#allocation5 + $0x60] sm:$0xff] %v258
    %275 = vst [vmem:[#allocation5 + $0x68] sm:$0xff] %v259
    %276 = vst [vmem:[#allocation5 + $0x70] sm:$0xff] %v260
    %277 = vst [vmem:[#allocation5 + $0x78] sm:$0xff] %v261
    // Predicated region
    $region18: #{tpu_custom_call.1} parent=1 // pred_check
      _
    $region19: #{tpu_custom_call.1} parent=1 // pred_check_branch
      %279 = sbr.rel (0) target = $region21
    $region20: #{tpu_custom_call.1} parent=1 // pred_region
      %s281 = ssub.s32 2048, 2048
      %282 = vsyncadd [#allocation4], %s281
      %s283 = sshll.u32 [#allocation5], 4
      %s284 = int_to_ptr.vmem [resolvable:$true] %s283
      %289 = dma.vmem_to_hbm [thread:$0]  %s284, 2048, %s3, [#allocation4], 256, 256, 16
    $region21: #{tpu_custom_call.1} parent=1 // pred_fallthru
      _
    // Predicated region
    $region22: #{tpu_custom_call.1} parent=1 // pred_check
      _
    $region23: #{tpu_custom_call.1} parent=1 // pred_check_branch
      %291 = sbr.rel (0) target = $region25
    $region24: #{tpu_custom_call.1} parent=1 // pred_region
      %292 = dma.done [#allocation4], 2048
    $region25: #{tpu_custom_call.1} parent=1 // pred_fallthru
      _
    %293 = vsyncpa [#allocation3], 1
    %294 = vsyncpa [#allocation4], 1

</llo_original>
